<compile_context>
chip_gen: v5e
topology: v5e:2x2
jax: 0.10.0
libtpu: 0.0.40
codegen_flags: <defaults>
</compile_context>

<pallas_src>
import functools

import numpy as np
import jax
import jax.numpy as jnp
from jax.experimental import pallas as pl
from jax.experimental.pallas import tpu as pltpu

_H1 = 128      # first hidden width (already lane-dense)
_PAD = 128     # lane-padded width for hidden-2 (64) and output (32)


def _round_up(x, m):
    return (x + m - 1) // m * m


def _mlp_kernel(x_ref, w1_ref, b1_ref, w2_ref, b2_ref, w3_ref, b3_ref, o_ref):
    cd = w1_ref.dtype  # compute dtype feeding the MXU (bf16 or f32)
    # Layer 1: (bb, in) @ (in, 128) + (1, 128) -> ReLU   (f32 accumulation)
    h = jnp.dot(x_ref[...], w1_ref[...], preferred_element_type=jnp.float32)
    h = jnp.maximum(h + b1_ref[...], 0.0)
    # Layer 2 (lane-padded to 128): (bb, 128) @ (128, 128) + (1, 128) -> ReLU
    h = jnp.dot(h.astype(cd), w2_ref[...], preferred_element_type=jnp.float32)
    h = jnp.maximum(h + b2_ref[...], 0.0)
    # Layer 3 (lane-padded to 128): (bb, 128) @ (128, 128) + (1, 128)
    h = jnp.dot(h.astype(cd), w3_ref[...], preferred_element_type=jnp.float32)
    o_ref[...] = (h + b3_ref[...]).astype(o_ref.dtype)


@functools.partial(jax.jit, static_argnames=("block_b", "compute_dtype"))
def mts_mlp_forward(x, params, *, block_b=512, compute_dtype=jnp.bfloat16):
    """x: (B, in_size) float32; params: dict with w1,b1,w2,b2,w3,b3 (weights (in,out))."""
    B, in_size = x.shape
    rep_dim = params["w3"].shape[1]
    out_dtype = jnp.float32

    cbytes = np.dtype(compute_dtype).itemsize
    sublane = 8 if cbytes >= 4 else 32 // cbytes  # 16 for bf16

    # Batch tile: large, sublane-aligned, clamped to the (padded) batch.
    bb = min(_round_up(block_b, sublane), _round_up(B, sublane))
    # Prefer >= 2 grid steps when the batch allows (v7x megacore sharding).
    if _round_up(B, bb) // bb < 2 and B >= 2 * sublane:
        bb = _round_up(pl.cdiv(_round_up(B, sublane), 2), sublane)
    B_pad = _round_up(B, bb)
    grid = (B_pad // bb,)

    # Cast x to the compute dtype and zero-pad the batch to the tile boundary.
    x_p = x.astype(compute_dtype)
    if B_pad != B:
        x_p = jnp.pad(x_p, ((0, B_pad - B), (0, 0)))

    # Lane-pad the narrow layers to 128 (zero columns/rows -> exact numerics).
    w1 = params["w1"].astype(compute_dtype)                               # (in, 128)
    b1 = params["b1"].reshape(1, -1).astype(jnp.float32)                  # (1, 128)
    w2 = jnp.pad(params["w2"],
                 ((0, 0), (0, _PAD - params["w2"].shape[1]))).astype(compute_dtype)       # (128, 128)
    b2 = jnp.pad(params["b2"].reshape(1, -1),
                 ((0, 0), (0, _PAD - params["b2"].reshape(1, -1).shape[1]))).astype(jnp.float32)
    w3 = jnp.pad(params["w3"],
                 ((0, _PAD - params["w3"].shape[0]),
                  (0, _PAD - params["w3"].shape[1]))).astype(compute_dtype)                # (128, 128)
    b3 = jnp.pad(params["b3"].reshape(1, -1),
                 ((0, 0), (0, _PAD - rep_dim))).astype(jnp.float32)

    def resident(arr):
        # Full-array block with a constant index map -> stays resident in VMEM.
        return pl.BlockSpec(arr.shape, lambda i: (0, 0))

    cost = pl.CostEstimate(
        flops=2 * B_pad * (in_size * _H1 + _H1 * _PAD + _PAD * _PAD),
        transcendentals=0,
        bytes_accessed=(x_p.size * x_p.dtype.itemsize
                        + B_pad * _PAD * np.dtype(out_dtype).itemsize
                        + sum(a.size * a.dtype.itemsize
                              for a in (w1, b1, w2, b2, w3, b3))),
    )

    out = pl.pallas_call(
        _mlp_kernel,
        out_shape=jax.ShapeDtypeStruct((B_pad, _PAD), out_dtype),
        grid_spec=pltpu.PrefetchScalarGridSpec(
            num_scalar_prefetch=0,
            grid=grid,
            in_specs=[
                pl.BlockSpec((bb, in_size), lambda i: (i, 0)),  # x tile
                resident(w1), resident(b1),
                resident(w2), resident(b2),
                resident(w3), resident(b3),
            ],
            out_specs=pl.BlockSpec((bb, _PAD), lambda i: (i, 0)),
        ),
        compiler_params=pltpu.CompilerParams(
            dimension_semantics=("parallel",)),
        cost_estimate=cost,
    )(x_p, w1, b1, w2, b2, w3, b3)

    # Strip batch padding and the zero-padded output lanes.
    return out[:B, :rep_dim]


def init_params(key, in_size, rep_dim=32):
    """Deterministic init mimicking nn.Linear default (uniform +/- 1/sqrt(fan_in)).
    Weights stored as (in_features, out_features)."""
    dims = [(in_size, 128), (128, 64), (64, rep_dim)]
    params = {}
    for idx, (fi, fo) in enumerate(dims, start=1):
        key, kw, kb = jax.random.split(key, 3)
        bound = 1.0 / jnp.sqrt(jnp.float32(fi))
        params[f"w{idx}"] = jax.random.uniform(
            kw, (fi, fo), jnp.float32, minval=-bound, maxval=bound)
        params[f"b{idx}"] = jax.random.uniform(
            kb, (1, fo), jnp.float32, minval=-bound, maxval=bound)
    return params


def reference_forward(x, params):
    h = jnp.maximum(x @ params["w1"] + params["b1"], 0.0)
    h = jnp.maximum(h @ params["w2"] + params["b2"], 0.0)
    return h @ params["w3"] + params["b3"]


if __name__ == "__main__":
    key = jax.random.PRNGKey(0)
    in_size = 32   # MTS_MLP(in_size=32)
    batch = 16

    kx, kp = jax.random.split(key)
    x = jax.random.normal(kx, (batch, in_size), jnp.float32)
    params = init_params(kp, in_size)
    ref = reference_forward(x, params)

    # Default path: bf16 inputs/weights, f32 accumulation.
    out_bf16 = jax.block_until_ready(mts_mlp_forward(x, params))
    assert out_bf16.shape == (batch, 32), out_bf16.shape
    assert jnp.allclose(out_bf16, ref, atol=5e-2, rtol=5e-2), "bf16 path mismatch"

    # f32 path: exact against the reference.
    out_f32 = jax.block_until_ready(
        mts_mlp_forward(x, params, compute_dtype=jnp.float32))
    assert jnp.allclose(out_f32, ref, atol=1e-5, rtol=1e-5), "f32 path mismatch"

    # Ragged batch exercises the batch-padding path.
    out_rag = jax.block_until_ready(
        mts_mlp_forward(x[:10], params, compute_dtype=jnp.float32))
    assert out_rag.shape == (10, 32), out_rag.shape
    assert jnp.allclose(out_rag, ref[:10], atol=1e-5, rtol=1e-5), "padding mismatch"

    print("KERNEL_OK")
</pallas_src>

<mosaic_0001>
module attributes {stable_mosaic.version = 11 : i64} {
  func.func @_mlp_kernel(%arg0: i32, %arg1: memref<16x32xbf16, #tpu.memory_space<vmem>>, %arg2: memref<32x128xbf16, #tpu.memory_space<vmem>>, %arg3: memref<1x128xf32, #tpu.memory_space<vmem>>, %arg4: memref<128x128xbf16, #tpu.memory_space<vmem>>, %arg5: memref<1x128xf32, #tpu.memory_space<vmem>>, %arg6: memref<128x128xbf16, #tpu.memory_space<vmem>>, %arg7: memref<1x128xf32, #tpu.memory_space<vmem>>, %arg8: memref<16x128xf32, #tpu.memory_space<vmem>>) attributes {dimension_semantics = [#tpu.dimension_semantics<parallel>], iteration_bounds = array<i64: 1>, scalar_prefetch = 0 : i64, scratch_operands = 0 : i64, tpu.core_type = #tpu.core_type<tc>, window_params = [{transform_indices = @transform_0, window_bounds = array<i64: 16, 32>}, {pipeline_mode = #tpu.pipeline_mode<synchronous>, transform_indices = @transform_1, window_bounds = array<i64: 32, 128>}, {pipeline_mode = #tpu.pipeline_mode<synchronous>, transform_indices = @transform_2, window_bounds = array<i64: 1, 128>}, {pipeline_mode = #tpu.pipeline_mode<synchronous>, transform_indices = @transform_3, window_bounds = array<i64: 128, 128>}, {pipeline_mode = #tpu.pipeline_mode<synchronous>, transform_indices = @transform_4, window_bounds = array<i64: 1, 128>}, {pipeline_mode = #tpu.pipeline_mode<synchronous>, transform_indices = @transform_5, window_bounds = array<i64: 128, 128>}, {pipeline_mode = #tpu.pipeline_mode<synchronous>, transform_indices = @transform_6, window_bounds = array<i64: 1, 128>}, {transform_indices = @transform_7, window_bounds = array<i64: 16, 128>}]} {
    %c0 = arith.constant 0 : index
    %c0_0 = arith.constant 0 : index
    %0 = vector.load %arg1[%c0, %c0_0] : memref<16x32xbf16, #tpu.memory_space<vmem>>, vector<16x32xbf16>
    %c0_1 = arith.constant 0 : index
    %c0_2 = arith.constant 0 : index
    %1 = vector.load %arg2[%c0_1, %c0_2] : memref<32x128xbf16, #tpu.memory_space<vmem>>, vector<32x128xbf16>
    %cst = arith.constant dense<0.000000e+00> : vector<16x128xf32>
    %2 = tpu.matmul %0, %1, %cst {dimension_numbers = #tpu.dot_dimension_numbers<[1], [0], [0], [1], [0, 0, 1, 1], [], []>} : vector<16x32xbf16>, vector<32x128xbf16>, vector<16x128xf32> -> vector<16x128xf32>
    %c0_3 = arith.constant 0 : index
    %c0_4 = arith.constant 0 : index
    %3 = vector.load %arg3[%c0_3, %c0_4] : memref<1x128xf32, #tpu.memory_space<vmem>>, vector<1x128xf32>
    %4 = vector.broadcast %3 : vector<1x128xf32> to vector<16x128xf32>
    %5 = arith.addf %2, %4 : vector<16x128xf32>
    %cst_5 = arith.constant 0.000000e+00 : f32
    %6 = vector.broadcast %cst_5 : f32 to vector<16x128xf32>
    %7 = arith.maximumf %5, %6 : vector<16x128xf32>
    %8 = arith.truncf %7 : vector<16x128xf32> to vector<16x128xbf16>
    %c0_6 = arith.constant 0 : index
    %c0_7 = arith.constant 0 : index
    %9 = vector.load %arg4[%c0_6, %c0_7] : memref<128x128xbf16, #tpu.memory_space<vmem>>, vector<128x128xbf16>
    %cst_8 = arith.constant dense<0.000000e+00> : vector<16x128xf32>
    %10 = tpu.matmul %8, %9, %cst_8 {dimension_numbers = #tpu.dot_dimension_numbers<[1], [0], [0], [1], [0, 0, 1, 1], [], []>} : vector<16x128xbf16>, vector<128x128xbf16>, vector<16x128xf32> -> vector<16x128xf32>
    %c0_9 = arith.constant 0 : index
    %c0_10 = arith.constant 0 : index
    %11 = vector.load %arg5[%c0_9, %c0_10] : memref<1x128xf32, #tpu.memory_space<vmem>>, vector<1x128xf32>
    %12 = vector.broadcast %11 : vector<1x128xf32> to vector<16x128xf32>
    %13 = arith.addf %10, %12 : vector<16x128xf32>
    %cst_11 = arith.constant 0.000000e+00 : f32
    %14 = vector.broadcast %cst_11 : f32 to vector<16x128xf32>
    %15 = arith.maximumf %13, %14 : vector<16x128xf32>
    %16 = arith.truncf %15 : vector<16x128xf32> to vector<16x128xbf16>
    %c0_12 = arith.constant 0 : index
    %c0_13 = arith.constant 0 : index
    %17 = vector.load %arg6[%c0_12, %c0_13] : memref<128x128xbf16, #tpu.memory_space<vmem>>, vector<128x128xbf16>
    %cst_14 = arith.constant dense<0.000000e+00> : vector<16x128xf32>
    %18 = tpu.matmul %16, %17, %cst_14 {dimension_numbers = #tpu.dot_dimension_numbers<[1], [0], [0], [1], [0, 0, 1, 1], [], []>} : vector<16x128xbf16>, vector<128x128xbf16>, vector<16x128xf32> -> vector<16x128xf32>
    %c0_15 = arith.constant 0 : index
    %c0_16 = arith.constant 0 : index
    %19 = vector.load %arg7[%c0_15, %c0_16] : memref<1x128xf32, #tpu.memory_space<vmem>>, vector<1x128xf32>
    %20 = vector.broadcast %19 : vector<1x128xf32> to vector<16x128xf32>
    %21 = arith.addf %18, %20 : vector<16x128xf32>
    %c0_17 = arith.constant 0 : index
    %c0_18 = arith.constant 0 : index
    %22 = vector.load %arg8[%c0_17, %c0_18] : memref<16x128xf32, #tpu.memory_space<vmem>>, vector<16x128xf32>
    tpu.vector_store %arg8[%c0_17, %c0_18], %21 {strides = array<i32>} : memref<16x128xf32, #tpu.memory_space<vmem>>, vector<16x128xf32>,
    return
  }
  func.func @transform_0(%arg0: i32) -> (i32, i32) {
    %c0_i32 = arith.constant 0 : i32
    %c0_i32_0 = arith.constant 0 : i32
    return %arg0, %c0_i32 : i32, i32
  }
  func.func @transform_1(%arg0: i32) -> (i32, i32) {
    %c0_i32 = arith.constant 0 : i32
    %c0_i32_0 = arith.constant 0 : i32
    %c0_i32_1 = arith.constant 0 : i32
    return %c0_i32, %c0_i32_0 : i32, i32
  }
  func.func @transform_2(%arg0: i32) -> (i32, i32) {
    %c0_i32 = arith.constant 0 : i32
    %c0_i32_0 = arith.constant 0 : i32
    %c0_i32_1 = arith.constant 0 : i32
    return %c0_i32, %c0_i32_0 : i32, i32
  }
  func.func @transform_3(%arg0: i32) -> (i32, i32) {
    %c0_i32 = arith.constant 0 : i32
    %c0_i32_0 = arith.constant 0 : i32
    %c0_i32_1 = arith.constant 0 : i32
    return %c0_i32, %c0_i32_0 : i32, i32
  }
  func.func @transform_4(%arg0: i32) -> (i32, i32) {
    %c0_i32 = arith.constant 0 : i32
    %c0_i32_0 = arith.constant 0 : i32
    %c0_i32_1 = arith.constant 0 : i32
    return %c0_i32, %c0_i32_0 : i32, i32
  }
  func.func @transform_5(%arg0: i32) -> (i32, i32) {
    %c0_i32 = arith.constant 0 : i32
    %c0_i32_0 = arith.constant 0 : i32
    %c0_i32_1 = arith.constant 0 : i32
    return %c0_i32, %c0_i32_0 : i32, i32
  }
  func.func @transform_6(%arg0: i32) -> (i32, i32) {
    %c0_i32 = arith.constant 0 : i32
    %c0_i32_0 = arith.constant 0 : i32
    %c0_i32_1 = arith.constant 0 : i32
    return %c0_i32, %c0_i32_0 : i32, i32
  }
  func.func @transform_7(%arg0: i32) -> (i32, i32) {
    %c0_i32 = arith.constant 0 : i32
    %c0_i32_0 = arith.constant 0 : i32
    return %arg0, %c0_i32 : i32, i32
  }
}

</mosaic_0001>

<llo_original>
// kernel: mts_mlp_forward.1
$region0: #{mts_mlp_forward.1}
  #allocation0 [shape = 'u32[]', space=smem, size = 0x4, offset = 0x4, fixed_abs, tag = 'smem constant byte address 0x4 - core index']
  #allocation1 [shape = 'u32[72,128]{1,0:T(1,128)}', space=vmem, size = 0x9000, scoped, tag = 'internal scratch']
  %s0 = inlined_call_operand.vmem [shape: bf16[16,32], index: 0, kind: input, shape index: {}]
  %s1 = inlined_call_operand.vmem [shape: bf16[32,128], index: 1, kind: input, shape index: {}]
  %s2 = inlined_call_operand.vmem [shape: f32[1,128], index: 2, kind: input, shape index: {}]
  %s3 = inlined_call_operand.vmem [shape: bf16[128,128], index: 3, kind: input, shape index: {}]
  %s4 = inlined_call_operand.vmem [shape: f32[1,128], index: 4, kind: input, shape index: {}]
  %s5 = inlined_call_operand.vmem [shape: bf16[128,128], index: 5, kind: input, shape index: {}]
  %s6 = inlined_call_operand.vmem [shape: f32[1,128], index: 6, kind: input, shape index: {}]
  %s7 = inlined_call_operand.hbm [shape: f32[16,128], index: 7, kind: output, shape index: {}]
  %s8 = sld [smem:[#allocation0]]
  $region38: #{mts_mlp_forward.1} parent=0
    _
  %s10 = ssub.s32 1, %s8
  %s11 = scalar_select 0, %s10, %s8
  $region1: #{mts_mlp_forward.1} parent=0
    #allocation2 [shape = 'u8[8192]{0}', space=vmem, size = 0x2000, scoped, tag = 'output window, operand 0, single buffered']
    #allocation3 [shape = 's32[1]{0}', space=sflag, size = 0x4, scoped, tag = 'scoped memory for mts_mlp_forward.1']
    %12 = vsyncpa [#allocation3], 0
    // Predicated region
    $region2: #{mts_mlp_forward.1} parent=1 // pred_check
      _
    $region3: #{mts_mlp_forward.1} parent=1 // pred_check_branch
      %14 = sbr.rel (0) target = $region5
    $region4: #{mts_mlp_forward.1} parent=1 // pred_region
      _
    $region5: #{mts_mlp_forward.1} parent=1 // pred_fallthru
      _
    // Predicated region
    $region6: #{mts_mlp_forward.1} parent=1 // pred_check
      _
    $region7: #{mts_mlp_forward.1} parent=1 // pred_check_branch
      %16 = sbr.rel (0) target = $region9
    $region8: #{mts_mlp_forward.1} parent=1 // pred_region
      _
    $region9: #{mts_mlp_forward.1} parent=1 // pred_fallthru
      _
    // Predicated region
    $region10: #{mts_mlp_forward.1} parent=1 // pred_check
      _
    $region11: #{mts_mlp_forward.1} parent=1 // pred_check_branch
      %18 = sbr.rel (0) target = $region13
    $region12: #{mts_mlp_forward.1} parent=1 // pred_region
      _
    $region13: #{mts_mlp_forward.1} parent=1 // pred_fallthru
      _
    // Predicated region
    $region14: #{mts_mlp_forward.1} parent=1 // pred_check
      _
    $region15: #{mts_mlp_forward.1} parent=1 // pred_check_branch
      %20 = sbr.rel (0) target = $region17
    $region16: #{mts_mlp_forward.1} parent=1 // pred_region
      _
    $region17: #{mts_mlp_forward.1} parent=1 // pred_fallthru
      _
    // Predicated region
    $region18: #{mts_mlp_forward.1} parent=1 // pred_check
      _
    $region19: #{mts_mlp_forward.1} parent=1 // pred_check_branch
      %22 = sbr.rel (0) target = $region21
    $region20: #{mts_mlp_forward.1} parent=1 // pred_region
      _
    $region21: #{mts_mlp_forward.1} parent=1 // pred_fallthru
      _
    // Predicated region
    $region22: #{mts_mlp_forward.1} parent=1 // pred_check
      _
    $region23: #{mts_mlp_forward.1} parent=1 // pred_check_branch
      %24 = sbr.rel (0) target = $region25
    $region24: #{mts_mlp_forward.1} parent=1 // pred_region
      _
    $region25: #{mts_mlp_forward.1} parent=1 // pred_fallthru
      _
    // Predicated region
    $region26: #{mts_mlp_forward.1} parent=1 // pred_check
      _
    $region27: #{mts_mlp_forward.1} parent=1 // pred_check_branch
      %26 = sbr.rel (0) target = $region29
    $region28: #{mts_mlp_forward.1} parent=1 // pred_region
      _
    $region29: #{mts_mlp_forward.1} parent=1 // pred_fallthru
      _
    %v28 = vld [vmem:[%s0] sm:$0xf]
    %v29 = vld [vmem:[%s0 + $0x4] sm:$0xf]
    %v30 = vld [vmem:[%s1] sm:$0xf]
    %v31 = vld [vmem:[%s1 + $0x4] sm:$0xf]
    %v32 = vld [vmem:[%s1 + $0x8] sm:$0xf]
    %v33 = vld [vmem:[%s1 + $0xc] sm:$0xf]
    %v34 = vld [vmem:[%s2] sm:$0x1]
    %v36 = vperm.slane %v34, 0
    %v40 = vunpack.c.l.b16 %v28
    %v41 = vunpack.c.l.b16 %v29
    %v42 = vpack.c.b16 %v41, %v40
    %v47 = vunpack.c.l.b16 %v30
    %v48 = vunpack.c.l.b16 %v31
    %v49 = vunpack.c.l.b16 %v32
    %v50 = vunpack.c.l.b16 %v33
    %v51 = vpack.c.b16 %v48, %v47
    %v52 = vpack.c.b16 %v50, %v49
    %vm55 = vcmask 261120
    %v57 = vsel %vm55, %v42, 0
    %59 = vmatpush.bf16.msra.mxu0 0
    %60 = vmatpush.bf16.msra.mxu0 0
    %61 = vmatpush.bf16.msra.mxu0 0
    %62 = vmatpush.bf16.msra.mxu0 0
    %63 = vmatpush.bf16.msra.mxu0 0
    %64 = vmatpush.bf16.msra.mxu0 0
    %65 = vmatpush.bf16.msra.mxu0 %v52
    %66 = vmatpush.bf16.msra.mxu0 %v51
    %67 = vmatmul.bf16.gmra.mxu0 %v57
    %v68 = vpop.f32.mrf.mxu0
    %v69 = vadd.f32 %v36, %v68
    %v70 = vpop.f32.mrf.mxu0
    %v71 = vadd.f32 %v36, %v70
    %72 = vdwg.mxu0
    %v73 = vmax.f32 %v69, 0.0
    %v74 = vmax.f32 %v71, 0.0
    %v75 = vpack.c.bf16 %v74, %v73
    %v76 = vld [vmem:[%s3] sm:$0xf]
    %v77 = vld [vmem:[%s3 + $0x4] sm:$0xf]
    %v78 = vld [vmem:[%s3 + $0x8] sm:$0xf]
    %v79 = vld [vmem:[%s3 + $0xc] sm:$0xf]
    %v80 = vld [vmem:[%s3 + $0x10] sm:$0xf]
    %v81 = vld [vmem:[%s3 + $0x14] sm:$0xf]
    %v82 = vld [vmem:[%s3 + $0x18] sm:$0xf]
    %v83 = vld [vmem:[%s3 + $0x1c] sm:$0xf]
    %v84 = vld [vmem:[%s3 + $0x20] sm:$0xf]
    %v85 = vld [vmem:[%s3 + $0x24] sm:$0xf]
    %v86 = vld [vmem:[%s3 + $0x28] sm:$0xf]
    %v87 = vld [vmem:[%s3 + $0x2c] sm:$0xf]
    %v88 = vld [vmem:[%s3 + $0x30] sm:$0xf]
    %v89 = vld [vmem:[%s3 + $0x34] sm:$0xf]
    %v90 = vld [vmem:[%s3 + $0x38] sm:$0xf]
    %v91 = vld [vmem:[%s3 + $0x3c] sm:$0xf]
    %v92 = vld [vmem:[%s4] sm:$0x1]
    %v94 = vperm.slane %v92, 0
    %v112 = vunpack.c.l.b16 %v76
    %v113 = vunpack.c.l.b16 %v77
    %v114 = vunpack.c.l.b16 %v78
    %v115 = vunpack.c.l.b16 %v79
    %v116 = vunpack.c.l.b16 %v80
    %v117 = vunpack.c.l.b16 %v81
    %v118 = vunpack.c.l.b16 %v82
    %v119 = vunpack.c.l.b16 %v83
    %v120 = vunpack.c.l.b16 %v84
    %v121 = vunpack.c.l.b16 %v85
    %v122 = vunpack.c.l.b16 %v86
    %v123 = vunpack.c.l.b16 %v87
    %v124 = vunpack.c.l.b16 %v88
    %v125 = vunpack.c.l.b16 %v89
    %v126 = vunpack.c.l.b16 %v90
    %v127 = vunpack.c.l.b16 %v91
    %v128 = vpack.c.b16 %v113, %v112
    %v129 = vpack.c.b16 %v115, %v114
    %v130 = vpack.c.b16 %v117, %v116
    %v131 = vpack.c.b16 %v119, %v118
    %v132 = vpack.c.b16 %v121, %v120
    %v133 = vpack.c.b16 %v123, %v122
    %v134 = vpack.c.b16 %v125, %v124
    %v135 = vpack.c.b16 %v127, %v126
    %144 = vmatpush.bf16.msra.mxu0 %v135
    %145 = vmatpush.bf16.msra.mxu0 %v134
    %146 = vmatpush.bf16.msra.mxu0 %v133
    %147 = vmatpush.bf16.msra.mxu0 %v132
    %148 = vmatpush.bf16.msra.mxu0 %v131
    %149 = vmatpush.bf16.msra.mxu0 %v130
    %150 = vmatpush.bf16.msra.mxu0 %v129
    %151 = vmatpush.bf16.msra.mxu0 %v128
    %152 = vmatmul.bf16.gmra.mxu0 %v75
    %v153 = vpop.f32.mrf.mxu0
    %v154 = vadd.f32 %v94, %v153
    %v155 = vpop.f32.mrf.mxu0
    %v156 = vadd.f32 %v94, %v155
    %157 = vdwg.mxu0
    %v158 = vmax.f32 %v154, 0.0
    %v159 = vmax.f32 %v156, 0.0
    %v160 = vpack.c.bf16 %v159, %v158
    %v161 = vld [vmem:[%s5] sm:$0xf]
    %v162 = vld [vmem:[%s5 + $0x4] sm:$0xf]
    %v163 = vld [vmem:[%s5 + $0x8] sm:$0xf]
    %v164 = vld [vmem:[%s5 + $0xc] sm:$0xf]
    %v165 = vld [vmem:[%s5 + $0x10] sm:$0xf]
    %v166 = vld [vmem:[%s5 + $0x14] sm:$0xf]
    %v167 = vld [vmem:[%s5 + $0x18] sm:$0xf]
    %v168 = vld [vmem:[%s5 + $0x1c] sm:$0xf]
    %v169 = vld [vmem:[%s5 + $0x20] sm:$0xf]
    %v170 = vld [vmem:[%s5 + $0x24] sm:$0xf]
    %v171 = vld [vmem:[%s5 + $0x28] sm:$0xf]
    %v172 = vld [vmem:[%s5 + $0x2c] sm:$0xf]
    %v173 = vld [vmem:[%s5 + $0x30] sm:$0xf]
    %v174 = vld [vmem:[%s5 + $0x34] sm:$0xf]
    %v175 = vld [vmem:[%s5 + $0x38] sm:$0xf]
    %v176 = vld [vmem:[%s5 + $0x3c] sm:$0xf]
    %v177 = vld [vmem:[%s6] sm:$0x1]
    %v179 = vperm.slane %v177, 0
    %v197 = vunpack.c.l.b16 %v161
    %v198 = vunpack.c.l.b16 %v162
    %v199 = vunpack.c.l.b16 %v163
    %v200 = vunpack.c.l.b16 %v164
    %v201 = vunpack.c.l.b16 %v165
    %v202 = vunpack.c.l.b16 %v166
    %v203 = vunpack.c.l.b16 %v167
    %v204 = vunpack.c.l.b16 %v168
    %v205 = vunpack.c.l.b16 %v169
    %v206 = vunpack.c.l.b16 %v170
    %v207 = vunpack.c.l.b16 %v171
    %v208 = vunpack.c.l.b16 %v172
    %v209 = vunpack.c.l.b16 %v173
    %v210 = vunpack.c.l.b16 %v174
    %v211 = vunpack.c.l.b16 %v175
    %v212 = vunpack.c.l.b16 %v176
    %v213 = vpack.c.b16 %v198, %v197
    %v214 = vpack.c.b16 %v200, %v199
    %v215 = vpack.c.b16 %v202, %v201
    %v216 = vpack.c.b16 %v204, %v203
    %v217 = vpack.c.b16 %v206, %v205
    %v218 = vpack.c.b16 %v208, %v207
    %v219 = vpack.c.b16 %v210, %v209
    %v220 = vpack.c.b16 %v212, %v211
    %229 = vmatpush.bf16.msra.mxu0 %v220
    %230 = vmatpush.bf16.msra.mxu0 %v219
    %231 = vmatpush.bf16.msra.mxu0 %v218
    %232 = vmatpush.bf16.msra.mxu0 %v217
    %233 = vmatpush.bf16.msra.mxu0 %v216
    %234 = vmatpush.bf16.msra.mxu0 %v215
    %235 = vmatpush.bf16.msra.mxu0 %v214
    %236 = vmatpush.bf16.msra.mxu0 %v213
    %237 = vmatmul.bf16.gmra.mxu0 %v160
    %v238 = vpop.f32.mrf.mxu0
    %v239 = vadd.f32 %v179, %v238
    %v240 = vpop.f32.mrf.mxu0
    %v241 = vadd.f32 %v179, %v240
    %242 = vdwg.mxu0
    %243 = vst [vmem:[#allocation2] sm:$0xff] %v239
    %244 = vst [vmem:[#allocation2 + $0x8] sm:$0xff] %v241
    // Predicated region
    $region30: #{mts_mlp_forward.1} parent=1 // pred_check
      _
    $region31: #{mts_mlp_forward.1} parent=1 // pred_check_branch
      %246 = sbr.rel (0) target = $region33
    $region32: #{mts_mlp_forward.1} parent=1 // pred_region
      %248 = vsyncadd [#allocation3], 0
      %s249 = sshll.u32 [#allocation2], 4
      %s250 = int_to_ptr.vmem [resolvable:$true] %s249
      %s251 = sshll.u32 %s7, 4
      %s252 = int_to_ptr.hbm [resolvable:$true] %s251
      %257 = dma.vmem_to_hbm [thread:$0]  %s250, 256, %s252, [#allocation3], 128, 128, 8
    $region33: #{mts_mlp_forward.1} parent=1 // pred_fallthru
      _
    // Predicated region
    $region34: #{mts_mlp_forward.1} parent=1 // pred_check
      _
    $region35: #{mts_mlp_forward.1} parent=1 // pred_check_branch
      %259 = sbr.rel (0) target = $region37
    $region36: #{mts_mlp_forward.1} parent=1 // pred_region
      %261 = dma.done [#allocation3], 256
    $region37: #{mts_mlp_forward.1} parent=1 // pred_fallthru
      _
    %262 = vsyncpa [#allocation3], 1

</llo_original>
